<compile_context>
chip_gen: v6e
topology: v6e:2x2x1
jax: 0.10.0
libtpu: 0.0.40
codegen_flags: <defaults>
</compile_context>

<pallas_src>
import functools

import jax
import jax.numpy as jnp
from jax import lax
from jax.experimental import pallas as pl
from jax.experimental.pallas import tpu as pltpu


def _round_up(x, m):
    return ((x + m - 1) // m) * m


def _largest_divisor_leq(n, cap):
    for c in range(min(cap, n), 0, -1):
        if n % c == 0:
            return c
    return 1


def _pick_tile(total, cap, unit):
    """Largest multiple of `unit` <= cap that divides `total` (total % unit == 0)."""
    cand = min(cap, total)
    cand -= cand % unit
    while cand >= unit:
        if total % cand == 0:
            return cand
        cand -= unit
    return unit


def _vmem_limit(nbytes):
    # Generous headroom, but capped below v7x's 64 MiB physical VMEM.
    return int(min(48 << 20, max(16 << 20, 4 * nbytes)))


# ----------------------------------------------------------------------------
# Kernel 1: time-chunked tanh-RNN recurrence.
# ----------------------------------------------------------------------------
def rnn_chunk_kernel(x_ref, h0_ref, wih_ref, whh_ref, b_ref,
                     hs_ref, hlast_ref, hcarry_ref, *, chunk_len, batch_pad):
    """One time chunk of the recurrence.

    x_ref:      (Tc*Bp, E)  bf16  embedded tokens for this chunk (time-major)
    h0_ref:     (Bp, H)     f32   initial hidden state
    wih_ref:    (E, H)      bf16  input->hidden weight (pre-transposed)
    whh_ref:    (H, H)      bf16  hidden->hidden weight (pre-transposed)
    b_ref:      (1, H)      f32   b_ih + b_hh
    hs_ref:     (Tc*Bp, H)  bf16  per-step hidden states for this chunk (output)
    hlast_ref:  (Bp, H)     f32   final hidden state (resident, flushed once)
    hcarry_ref: (Bp, H)     f32   VMEM scratch: carry across grid steps
    """
    @pl.when(pl.program_id(0) == 0)
    def _init():
        hcarry_ref[...] = h0_ref[...]

    # Chunk prologue: input projection for all timesteps of this chunk as one
    # MXU matmul (bf16 x bf16 -> f32), stored directly into the output block.
    xproj = jnp.dot(x_ref[...], wih_ref[...],
                    preferred_element_type=jnp.float32) + b_ref[...]
    hs_ref[...] = xproj.astype(hs_ref.dtype)

    w_hh = whh_ref[...]  # bf16, loaded once per chunk

    def step(t, h_prev):
        row = pl.multiple_of(t * batch_pad, batch_pad)
        pre = hs_ref[pl.ds(row, batch_pad), :].astype(jnp.float32) + jnp.dot(
            h_prev.astype(jnp.bfloat16), w_hh,
            preferred_element_type=jnp.float32)
        h_new = jnp.tanh(pre)                                  # carry stays f32
        hs_ref[pl.ds(row, batch_pad), :] = h_new.astype(hs_ref.dtype)
        return h_new

    # The chunk length bounds the unroll of the serial recurrence.
    h_last = lax.fori_loop(0, chunk_len, step, hcarry_ref[...], unroll=True)
    hcarry_ref[...] = h_last
    hlast_ref[...] = h_last   # constant block index -> written back once at end


# ----------------------------------------------------------------------------
# Kernel 2: tiled FC projection (rows x vocab tiles), parallel on both axes.
# ----------------------------------------------------------------------------
def fc_kernel(h_ref, w_ref, b_ref, o_ref):
    o_ref[...] = (jnp.dot(h_ref[...], w_ref[...],
                          preferred_element_type=jnp.float32)
                  + b_ref[...]).astype(o_ref.dtype)


def tinyllm_forward(x_tokens, params, hidden=None, *, time_chunk=4):
    """Matches TinyLLM.forward: returns (logits (B,T,V), hidden (1,B,H))."""
    embed_tbl = params["embed"]            # (V, E)
    w_ih = params["w_ih"]                  # (E, H)
    w_hh = params["w_hh"]                  # (H, H)
    b_rnn = params["b_rnn"]                # (1, H)
    w_fc = params["w_fc"]                  # (H, V)
    b_fc = params["b_fc"]                  # (1, V)

    B, T = x_tokens.shape
    V, E = embed_tbl.shape
    H = w_hh.shape[0]

    Bp = _round_up(max(B, 8), 8)                    # f32 sublane tile
    Vp = _round_up(V, 128)                          # lane-dense logits store
    Tc = _largest_divisor_leq(T, max(1, time_chunk))  # time chunk (divides T)
    n_chunks = T // Tc

    # --- Embedding lookup (plain-JAX glue): bf16 gather, pad folded in -------
    tok_p = jnp.pad(x_tokens, ((0, Bp - B), (0, 0)))            # (Bp, T)
    x_tm = jnp.take(embed_tbl.astype(jnp.bfloat16), tok_p.T, axis=0)  # (T, Bp, E)
    x_flat = x_tm.reshape(T * Bp, E)                            # (T*Bp, E) bf16

    if hidden is None:
        h0 = jnp.zeros((Bp, H), jnp.float32)
    else:
        h0 = jnp.pad(hidden.reshape(B, H).astype(jnp.float32),
                     ((0, Bp - B), (0, 0)))

    w_ih_b = w_ih.astype(jnp.bfloat16)
    w_hh_b = w_hh.astype(jnp.bfloat16)
    b_rnn_f = b_rnn.astype(jnp.float32)

    chunk_rows = Tc * Bp
    rnn_bytes = (2 * chunk_rows * E * 2          # x chunk (double-buffered, bf16)
                 + 2 * chunk_rows * H * 2        # hs chunk (double-buffered, bf16)
                 + 2 * (E * H + H * H) * 2       # weights (bf16)
                 + 2 * H * 4                     # bias
                 + 3 * 2 * Bp * H * 4            # h0 / hlast / carry (f32)
                 + chunk_rows * H * 4)           # transient xproj (f32)

    rnn_kernel = functools.partial(rnn_chunk_kernel, chunk_len=Tc, batch_pad=Bp)

    hs_flat, h_last = pl.pallas_call(
        rnn_kernel,
        out_shape=(
            jax.ShapeDtypeStruct((T * Bp, H), jnp.bfloat16),   # per-step hidden
            jax.ShapeDtypeStruct((Bp, H), jnp.float32),        # final hidden
        ),
        grid_spec=pltpu.PrefetchScalarGridSpec(
            num_scalar_prefetch=0,
            grid=(n_chunks,),
            in_specs=[
                pl.BlockSpec((chunk_rows, E), lambda i: (i, 0)),  # x chunk (streamed)
                pl.BlockSpec((Bp, H),         lambda i: (0, 0)),  # h0
                pl.BlockSpec((E, H),          lambda i: (0, 0)),  # w_ih
                pl.BlockSpec((H, H),          lambda i: (0, 0)),  # w_hh
                pl.BlockSpec((1, H),          lambda i: (0, 0)),  # b_rnn
            ],
            out_specs=[
                pl.BlockSpec((chunk_rows, H), lambda i: (i, 0)),  # hs chunk (streamed)
                pl.BlockSpec((Bp, H),         lambda i: (0, 0)),  # final hidden
            ],
            scratch_shapes=[
                pltpu.VMEM((Bp, H), jnp.float32),                 # carried hidden
            ],
        ),
        compiler_params=pltpu.CompilerParams(
            dimension_semantics=("arbitrary",),     # serial recurrence over time
            vmem_limit_bytes=_vmem_limit(rnn_bytes),
        ),
    )(x_flat, h0, w_ih_b, w_hh_b, b_rnn_f)

    # --- FC projection over the B valid rows only (no Bp padding blowup) -----
    hs_valid = hs_flat.reshape(T, Bp, H)[:, :B, :].reshape(T * B, H)   # bf16
    R = T * B
    Rp = _round_up(R, 8)
    hs_p = jnp.pad(hs_valid, ((0, Rp - R), (0, 0)))

    tr = _pick_tile(Rp, 128, 8)
    tn = _pick_tile(Vp, 512, 128)

    w_fc_p = jnp.pad(w_fc, ((0, 0), (0, Vp - V))).astype(jnp.bfloat16)
    b_fc_p = jnp.pad(b_fc, ((0, 0), (0, Vp - V))).astype(jnp.float32)

    fc_bytes = 2 * (tr * H * 2 + H * tn * 2 + tn * 4 + tr * tn * 4)

    logits_p = pl.pallas_call(
        fc_kernel,
        out_shape=jax.ShapeDtypeStruct((Rp, Vp), jnp.float32),
        grid_spec=pltpu.PrefetchScalarGridSpec(
            num_scalar_prefetch=0,
            grid=(Rp // tr, Vp // tn),
            in_specs=[
                pl.BlockSpec((tr, H),  lambda i, j: (i, 0)),
                pl.BlockSpec((H, tn),  lambda i, j: (0, j)),
                pl.BlockSpec((1, tn),  lambda i, j: (0, j)),
            ],
            out_specs=pl.BlockSpec((tr, tn), lambda i, j: (i, j)),
        ),
        compiler_params=pltpu.CompilerParams(
            dimension_semantics=("parallel", "parallel"),  # shards across TCs on v7x
            vmem_limit_bytes=_vmem_limit(fc_bytes),
        ),
    )(hs_p, w_fc_p, b_fc_p)

    # Strip padding, restore batch-first layout.
    logits = logits_p[:R, :V].reshape(T, B, V)
    logits = jnp.transpose(logits, (1, 0, 2))                  # (B, T, V)
    hidden_out = h_last[:B][None, :, :]                        # (1, B, H)
    return logits, hidden_out


def tinyllm_reference(x_tokens, params, hidden=None):
    """Pure-JAX f32 reference (lax.scan) for correctness checking."""
    embed_tbl = params["embed"]
    w_ih, w_hh, b_rnn = params["w_ih"], params["w_hh"], params["b_rnn"]
    w_fc, b_fc = params["w_fc"], params["b_fc"]
    B, T = x_tokens.shape
    H = w_hh.shape[0]
    x_emb = jnp.take(embed_tbl, x_tokens, axis=0)              # (B, T, E)
    h0 = jnp.zeros((B, H), jnp.float32) if hidden is None else hidden.reshape(B, H)

    def step(h, x_t):
        h_new = jnp.tanh(x_t @ w_ih + h @ w_hh + b_rnn)
        return h_new, h_new

    h_last, hs = jax.lax.scan(step, h0, jnp.transpose(x_emb, (1, 0, 2)))
    outputs = jnp.transpose(hs, (1, 0, 2))                     # (B, T, H)
    logits = outputs @ w_fc + b_fc                             # (B, T, V)
    return logits, h_last[None, :, :]


def init_params(key, vocab_size, embedding_dim=64, hidden_dim=128):
    """Deterministic synthetic parameters (shapes per TinyLLM.__init__)."""
    ks = jax.random.split(key, 7)
    scale = 0.1
    embed = jax.random.normal(ks[0], (vocab_size, embedding_dim), jnp.float32) * scale
    # PyTorch nn.RNN stores weight_ih (H,E), weight_hh (H,H); pre-transposed here.
    w_ih = jax.random.normal(ks[1], (embedding_dim, hidden_dim), jnp.float32) * scale
    w_hh = jax.random.normal(ks[2], (hidden_dim, hidden_dim), jnp.float32) * scale
    b_ih = jax.random.normal(ks[3], (hidden_dim,), jnp.float32) * scale
    b_hh = jax.random.normal(ks[4], (hidden_dim,), jnp.float32) * scale
    # nn.Linear stores weight (V,H); pre-transposed to (H,V).
    w_fc = jax.random.normal(ks[5], (hidden_dim, vocab_size), jnp.float32) * scale
    b_fc = jax.random.normal(ks[6], (vocab_size,), jnp.float32) * scale
    return {
        "embed": embed,
        "w_ih": w_ih,
        "w_hh": w_hh,
        "b_rnn": (b_ih + b_hh)[None, :],   # (1, H)
        "w_fc": w_fc,
        "b_fc": b_fc[None, :],             # (1, V)
    }


if __name__ == "__main__":
    key = jax.random.PRNGKey(0)
    vocab_size, embedding_dim, hidden_dim = 32, 64, 128
    batch, seq = 2, 8

    pkey, xkey = jax.random.split(key)
    params = init_params(pkey, vocab_size, embedding_dim, hidden_dim)
    x_tokens = jax.random.randint(xkey, (batch, seq), 0, vocab_size, dtype=jnp.int32)

    logits, hidden = tinyllm_forward(x_tokens, params, hidden=None)
    logits = jax.block_until_ready(logits)
    hidden = jax.block_until_ready(hidden)

    # Verify against the pure-JAX f32 reference.  The kernels use bf16 MXU
    # operands with f32 accumulation, so the tolerance is loosened accordingly.
    ref_logits, ref_hidden = tinyllm_reference(x_tokens, params, hidden=None)
    assert logits.shape == (batch, seq, vocab_size)
    assert hidden.shape == (1, batch, hidden_dim)
    assert jnp.allclose(logits, ref_logits, atol=3e-2, rtol=3e-2)
    assert jnp.allclose(hidden, ref_hidden, atol=3e-2, rtol=3e-2)

    print("KERNEL_OK")
</pallas_src>

<mosaic_0001>
module attributes {stable_mosaic.version = 11 : i64} {
  func.func @rnn_chunk_kernel(%arg0: i32, %arg1: memref<32x64xbf16, #tpu.memory_space<vmem>>, %arg2: memref<8x128xf32, #tpu.memory_space<vmem>>, %arg3: memref<64x128xbf16, #tpu.memory_space<vmem>>, %arg4: memref<128x128xbf16, #tpu.memory_space<vmem>>, %arg5: memref<1x128xf32, #tpu.memory_space<vmem>>, %arg6: memref<32x128xbf16, #tpu.memory_space<vmem>>, %arg7: memref<8x128xf32, #tpu.memory_space<vmem>>, %arg8: memref<8x128xf32, #tpu.memory_space<vmem>>) attributes {dimension_semantics = [#tpu.dimension_semantics<arbitrary>], iteration_bounds = array<i64: 2>, scalar_prefetch = 0 : i64, scratch_operands = 1 : i64, tpu.core_type = #tpu.core_type<tc>, window_params = [{transform_indices = @transform_0, window_bounds = array<i64: 32, 64>}, {pipeline_mode = #tpu.pipeline_mode<synchronous>, transform_indices = @transform_1, window_bounds = array<i64: 8, 128>}, {pipeline_mode = #tpu.pipeline_mode<synchronous>, transform_indices = @transform_2, window_bounds = array<i64: 64, 128>}, {pipeline_mode = #tpu.pipeline_mode<synchronous>, transform_indices = @transform_3, window_bounds = array<i64: 128, 128>}, {pipeline_mode = #tpu.pipeline_mode<synchronous>, transform_indices = @transform_4, window_bounds = array<i64: 1, 128>}, {transform_indices = @transform_5, window_bounds = array<i64: 32, 128>}, {pipeline_mode = #tpu.pipeline_mode<synchronous>, transform_indices = @transform_6, window_bounds = array<i64: 8, 128>}]} {
    %c0_i32 = arith.constant 0 : i32
    %0 = arith.cmpi eq, %arg0, %c0_i32 : i32
    %1 = arith.extui %0 : i1 to i32
    %c0_i32_0 = arith.constant 0 : i32
    %2 = arith.cmpi ne, %1, %c0_i32_0 : i32
    scf.if %2 {
      %c0_32 = arith.constant 0 : index
      %c0_33 = arith.constant 0 : index
      %63 = vector.load %arg2[%c0_32, %c0_33] : memref<8x128xf32, #tpu.memory_space<vmem>>, vector<8x128xf32>
      %c0_34 = arith.constant 0 : index
      %c0_35 = arith.constant 0 : index
      %64 = vector.load %arg8[%c0_34, %c0_35] : memref<8x128xf32, #tpu.memory_space<vmem>>, vector<8x128xf32>
      tpu.vector_store %arg8[%c0_34, %c0_35], %63 {strides = array<i32>} : memref<8x128xf32, #tpu.memory_space<vmem>>, vector<8x128xf32>,
    } else {
    }
    %c0 = arith.constant 0 : index
    %c0_1 = arith.constant 0 : index
    %3 = vector.load %arg1[%c0, %c0_1] : memref<32x64xbf16, #tpu.memory_space<vmem>>, vector<32x64xbf16>
    %c0_2 = arith.constant 0 : index
    %c0_3 = arith.constant 0 : index
    %4 = vector.load %arg3[%c0_2, %c0_3] : memref<64x128xbf16, #tpu.memory_space<vmem>>, vector<64x128xbf16>
    %cst = arith.constant dense<0.000000e+00> : vector<32x128xf32>
    %5 = tpu.matmul %3, %4, %cst {dimension_numbers = #tpu.dot_dimension_numbers<[1], [0], [0], [1], [0, 0, 1, 1], [], []>} : vector<32x64xbf16>, vector<64x128xbf16>, vector<32x128xf32> -> vector<32x128xf32>
    %c0_4 = arith.constant 0 : index
    %c0_5 = arith.constant 0 : index
    %6 = vector.load %arg5[%c0_4, %c0_5] : memref<1x128xf32, #tpu.memory_space<vmem>>, vector<1x128xf32>
    %7 = vector.broadcast %6 : vector<1x128xf32> to vector<32x128xf32>
    %8 = arith.addf %5, %7 : vector<32x128xf32>
    %9 = arith.truncf %8 : vector<32x128xf32> to vector<32x128xbf16>
    %c0_6 = arith.constant 0 : index
    %c0_7 = arith.constant 0 : index
    %10 = vector.load %arg6[%c0_6, %c0_7] : memref<32x128xbf16, #tpu.memory_space<vmem>>, vector<32x128xbf16>
    tpu.vector_store %arg6[%c0_6, %c0_7], %9 {strides = array<i32>} : memref<32x128xbf16, #tpu.memory_space<vmem>>, vector<32x128xbf16>,
    %c0_8 = arith.constant 0 : index
    %c0_9 = arith.constant 0 : index
    %11 = vector.load %arg4[%c0_8, %c0_9] : memref<128x128xbf16, #tpu.memory_space<vmem>>, vector<128x128xbf16>
    %c0_10 = arith.constant 0 : index
    %c0_11 = arith.constant 0 : index
    %12 = vector.load %arg8[%c0_10, %c0_11] : memref<8x128xf32, #tpu.memory_space<vmem>>, vector<8x128xf32>
    %c0_i32_12 = arith.constant 0 : i32
    %c8_i32 = arith.constant 8 : i32
    %13 = arith.muli %c0_i32_12, %c8_i32 : i32
    %14 = tpu.assume_multiple %13, 8 : i32
    %15 = arith.index_cast %14 : i32 to index
    %c0_13 = arith.constant 0 : index
    %16 = vector.load %arg6[%15, %c0_13] : memref<32x128xbf16, #tpu.memory_space<vmem>>, vector<8x128xbf16>
    %17 = arith.extf %16 : vector<8x128xbf16> to vector<8x128xf32>
    %18 = arith.truncf %12 : vector<8x128xf32> to vector<8x128xbf16>
    %cst_14 = arith.constant dense<0.000000e+00> : vector<8x128xf32>
    %19 = tpu.matmul %18, %11, %cst_14 {dimension_numbers = #tpu.dot_dimension_numbers<[1], [0], [0], [1], [0, 0, 1, 1], [], []>} : vector<8x128xbf16>, vector<128x128xbf16>, vector<8x128xf32> -> vector<8x128xf32>
    %20 = arith.addf %17, %19 : vector<8x128xf32>
    %21 = math.tanh %20 : vector<8x128xf32>
    %22 = arith.truncf %21 : vector<8x128xf32> to vector<8x128xbf16>
    %23 = arith.index_cast %14 : i32 to index
    %c0_15 = arith.constant 0 : index
    %24 = vector.load %arg6[%23, %c0_15] : memref<32x128xbf16, #tpu.memory_space<vmem>>, vector<8x128xbf16>
    tpu.vector_store %arg6[%23, %c0_15], %22 {strides = array<i32>} : memref<32x128xbf16, #tpu.memory_space<vmem>>, vector<8x128xbf16>,
    %c1_i32 = arith.constant 1 : i32
    %c8_i32_16 = arith.constant 8 : i32
    %25 = arith.muli %c1_i32, %c8_i32_16 : i32
    %26 = tpu.assume_multiple %25, 8 : i32
    %27 = arith.index_cast %26 : i32 to index
    %c0_17 = arith.constant 0 : index
    %28 = vector.load %arg6[%27, %c0_17] : memref<32x128xbf16, #tpu.memory_space<vmem>>, vector<8x128xbf16>
    %29 = arith.extf %28 : vector<8x128xbf16> to vector<8x128xf32>
    %30 = arith.truncf %21 : vector<8x128xf32> to vector<8x128xbf16>
    %cst_18 = arith.constant dense<0.000000e+00> : vector<8x128xf32>
    %31 = tpu.matmul %30, %11, %cst_18 {dimension_numbers = #tpu.dot_dimension_numbers<[1], [0], [0], [1], [0, 0, 1, 1], [], []>} : vector<8x128xbf16>, vector<128x128xbf16>, vector<8x128xf32> -> vector<8x128xf32>
    %32 = arith.addf %29, %31 : vector<8x128xf32>
    %33 = math.tanh %32 : vector<8x128xf32>
    %34 = arith.truncf %33 : vector<8x128xf32> to vector<8x128xbf16>
    %35 = arith.index_cast %26 : i32 to index
    %c0_19 = arith.constant 0 : index
    %36 = vector.load %arg6[%35, %c0_19] : memref<32x128xbf16, #tpu.memory_space<vmem>>, vector<8x128xbf16>
    tpu.vector_store %arg6[%35, %c0_19], %34 {strides = array<i32>} : memref<32x128xbf16, #tpu.memory_space<vmem>>, vector<8x128xbf16>,
    %c2_i32 = arith.constant 2 : i32
    %c8_i32_20 = arith.constant 8 : i32
    %37 = arith.muli %c2_i32, %c8_i32_20 : i32
    %38 = tpu.assume_multiple %37, 8 : i32
    %39 = arith.index_cast %38 : i32 to index
    %c0_21 = arith.constant 0 : index
    %40 = vector.load %arg6[%39, %c0_21] : memref<32x128xbf16, #tpu.memory_space<vmem>>, vector<8x128xbf16>
    %41 = arith.extf %40 : vector<8x128xbf16> to vector<8x128xf32>
    %42 = arith.truncf %33 : vector<8x128xf32> to vector<8x128xbf16>
    %cst_22 = arith.constant dense<0.000000e+00> : vector<8x128xf32>
    %43 = tpu.matmul %42, %11, %cst_22 {dimension_numbers = #tpu.dot_dimension_numbers<[1], [0], [0], [1], [0, 0, 1, 1], [], []>} : vector<8x128xbf16>, vector<128x128xbf16>, vector<8x128xf32> -> vector<8x128xf32>
    %44 = arith.addf %41, %43 : vector<8x128xf32>
    %45 = math.tanh %44 : vector<8x128xf32>
    %46 = arith.truncf %45 : vector<8x128xf32> to vector<8x128xbf16>
    %47 = arith.index_cast %38 : i32 to index
    %c0_23 = arith.constant 0 : index
    %48 = vector.load %arg6[%47, %c0_23] : memref<32x128xbf16, #tpu.memory_space<vmem>>, vector<8x128xbf16>
    tpu.vector_store %arg6[%47, %c0_23], %46 {strides = array<i32>} : memref<32x128xbf16, #tpu.memory_space<vmem>>, vector<8x128xbf16>,
    %c3_i32 = arith.constant 3 : i32
    %c8_i32_24 = arith.constant 8 : i32
    %49 = arith.muli %c3_i32, %c8_i32_24 : i32
    %50 = tpu.assume_multiple %49, 8 : i32
    %51 = arith.index_cast %50 : i32 to index
    %c0_25 = arith.constant 0 : index
    %52 = vector.load %arg6[%51, %c0_25] : memref<32x128xbf16, #tpu.memory_space<vmem>>, vector<8x128xbf16>
    %53 = arith.extf %52 : vector<8x128xbf16> to vector<8x128xf32>
    %54 = arith.truncf %45 : vector<8x128xf32> to vector<8x128xbf16>
    %cst_26 = arith.constant dense<0.000000e+00> : vector<8x128xf32>
    %55 = tpu.matmul %54, %11, %cst_26 {dimension_numbers = #tpu.dot_dimension_numbers<[1], [0], [0], [1], [0, 0, 1, 1], [], []>} : vector<8x128xbf16>, vector<128x128xbf16>, vector<8x128xf32> -> vector<8x128xf32>
    %56 = arith.addf %53, %55 : vector<8x128xf32>
    %57 = math.tanh %56 : vector<8x128xf32>
    %58 = arith.truncf %57 : vector<8x128xf32> to vector<8x128xbf16>
    %59 = arith.index_cast %50 : i32 to index
    %c0_27 = arith.constant 0 : index
    %60 = vector.load %arg6[%59, %c0_27] : memref<32x128xbf16, #tpu.memory_space<vmem>>, vector<8x128xbf16>
    tpu.vector_store %arg6[%59, %c0_27], %58 {strides = array<i32>} : memref<32x128xbf16, #tpu.memory_space<vmem>>, vector<8x128xbf16>,
    %c4_i32 = arith.constant 4 : i32
    %c0_28 = arith.constant 0 : index
    %c0_29 = arith.constant 0 : index
    %61 = vector.load %arg8[%c0_28, %c0_29] : memref<8x128xf32, #tpu.memory_space<vmem>>, vector<8x128xf32>
    tpu.vector_store %arg8[%c0_28, %c0_29], %57 {strides = array<i32>} : memref<8x128xf32, #tpu.memory_space<vmem>>, vector<8x128xf32>,
    %c0_30 = arith.constant 0 : index
    %c0_31 = arith.constant 0 : index
    %62 = vector.load %arg7[%c0_30, %c0_31] : memref<8x128xf32, #tpu.memory_space<vmem>>, vector<8x128xf32>
    tpu.vector_store %arg7[%c0_30, %c0_31], %57 {strides = array<i32>} : memref<8x128xf32, #tpu.memory_space<vmem>>, vector<8x128xf32>,
    return
  }
  func.func @transform_0(%arg0: i32) -> (i32, i32) {
    %c0_i32 = arith.constant 0 : i32
    %c0_i32_0 = arith.constant 0 : i32
    return %arg0, %c0_i32 : i32, i32
  }
  func.func @transform_1(%arg0: i32) -> (i32, i32) {
    %c0_i32 = arith.constant 0 : i32
    %c0_i32_0 = arith.constant 0 : i32
    %c0_i32_1 = arith.constant 0 : i32
    return %c0_i32, %c0_i32_0 : i32, i32
  }
  func.func @transform_2(%arg0: i32) -> (i32, i32) {
    %c0_i32 = arith.constant 0 : i32
    %c0_i32_0 = arith.constant 0 : i32
    %c0_i32_1 = arith.constant 0 : i32
    return %c0_i32, %c0_i32_0 : i32, i32
  }
  func.func @transform_3(%arg0: i32) -> (i32, i32) {
    %c0_i32 = arith.constant 0 : i32
    %c0_i32_0 = arith.constant 0 : i32
    %c0_i32_1 = arith.constant 0 : i32
    return %c0_i32, %c0_i32_0 : i32, i32
  }
  func.func @transform_4(%arg0: i32) -> (i32, i32) {
    %c0_i32 = arith.constant 0 : i32
    %c0_i32_0 = arith.constant 0 : i32
    %c0_i32_1 = arith.constant 0 : i32
    return %c0_i32, %c0_i32_0 : i32, i32
  }
  func.func @transform_5(%arg0: i32) -> (i32, i32) {
    %c0_i32 = arith.constant 0 : i32
    %c0_i32_0 = arith.constant 0 : i32
    return %arg0, %c0_i32 : i32, i32
  }
  func.func @transform_6(%arg0: i32) -> (i32, i32) {
    %c0_i32 = arith.constant 0 : i32
    %c0_i32_0 = arith.constant 0 : i32
    %c0_i32_1 = arith.constant 0 : i32
    return %c0_i32, %c0_i32_0 : i32, i32
  }
}

</mosaic_0001>

<llo_original>
// kernel: tpu_custom_call.1
$region0: #{tpu_custom_call.1}
  #allocation0 [shape = 'u32[]', space=smem, size = 0x4, offset = 0x4, fixed_abs, tag = 'smem constant byte address 0x4 - core index']
  #allocation1 [shape = 'u32[144,128]{1,0:T(1,128)}', space=vmem, size = 0x12000, scoped, tag = 'internal scratch']
  #allocation2 [shape = 'f32[8,128]{1,0:T(8,128)}', space=vmem, size = 0x1000, scoped, tag = 'scratch operand']
  %s0 = inlined_call_operand.hbm [shape: bf16[64,64], index: 0, kind: input, shape index: {}]
  %s1 = inlined_call_operand.hbm [shape: f32[8,128], index: 1, kind: input, shape index: {}]
  %s2 = inlined_call_operand.hbm [shape: bf16[64,128], index: 2, kind: input, shape index: {}]
  %s3 = inlined_call_operand.hbm [shape: bf16[128,128], index: 3, kind: input, shape index: {}]
  %s4 = inlined_call_operand.vmem [shape: f32[1,128], index: 4, kind: input, shape index: {}]
  %s5 = inlined_call_operand.hbm [shape: bf16[64,128], index: 5, kind: output, shape index: {0}]
  %s6 = inlined_call_operand.hbm [shape: f32[8,128], index: 6, kind: output, shape index: {1}]
  %7 = xla_tuple %s5, %s6
  %s8 = sld [smem:[#allocation0]]
  $region81: #{tpu_custom_call.1} parent=0
    _
  %s10 = ssub.s32 1, %s8
  %s11 = scalar_select 0, %s10, %s8
  $region1: #{tpu_custom_call.1} parent=0
    #allocation3 [shape = 'u8[16384]{0}', space=vmem, size = 0x4000, scoped, tag = 'input window, operand 0']
    #allocation4 [shape = 's32[2]{0}', space=sflag, size = 0x8, scoped, tag = 'scoped memory for tpu_custom_call.1']
    #allocation5 [shape = 's32[2]{0}', space=sflag, size = 0x8, scoped, tag = 'scoped memory for tpu_custom_call.1']
    #allocation6 [shape = 'u8[4096]{0}', space=vmem, size = 0x1000, scoped, tag = 'input window, operand 1, single buffered']
    #allocation7 [shape = 's32[1]{0}', space=sflag, size = 0x4, scoped, tag = 'scoped memory for tpu_custom_call.1']
    #allocation8 [shape = 'u8[16384]{0}', space=vmem, size = 0x4000, scoped, tag = 'input window, operand 2, single buffered']
    #allocation9 [shape = 'u8[32768]{0}', space=vmem, size = 0x8000, scoped, tag = 'input window, operand 3, single buffered']
    #allocation10 [shape = 's32[1]{0}', space=sflag, size = 0x4, scoped, tag = 'scoped memory for tpu_custom_call.1']
    #allocation11 [shape = 'u8[16384]{0}', space=vmem, size = 0x4000, scoped, tag = 'output window, operand 0']
    #allocation12 [shape = 'u8[4096]{0}', space=vmem, size = 0x1000, scoped, tag = 'output window, operand 1, single buffered']
    #allocation13 [shape = 's32[1]{0}', space=sflag, size = 0x4, scoped, tag = 'scoped memory for tpu_custom_call.1']
    %12 = vsyncpa [#allocation4], 0
    %s13 = scalar_lea.sflag [#allocation4], 1
    %14 = vsyncpa %s13, 0
    %15 = vsyncpa [#allocation7], 0
    %16 = vsyncpa [#allocation10], 0
    %17 = vsyncpa [#allocation5], 0
    %s18 = scalar_lea.sflag [#allocation5], 1
    %19 = vsyncpa %s18, 0
    %20 = vsyncpa [#allocation13], 0
    loop: start=0, step=1, limit=4
    $region2: #{tpu_custom_call.1} parent=1 // loop_pre_header
      _
    $region3: #{tpu_custom_call.1} parent=1 // loop_header
      %s22 = sphi 0, %s26
      %p23 = scmp.ge.s32.totalorder %s22, 4
      %s32 = sphi 0, %s34
      %s35 = sphi 0, %s32
      %s36 = sphi 0, %s35
      %s52 = sphi 0, %s36
      %s56 = sphi 0, %s56
      %s58 = sphi 0, %s56
      %s59 = sphi 0, %s58
      %s73 = sphi 0, %s59
      %s77 = sphi 0, %s77
      %s79 = sphi 0, %s77
      %s80 = sphi 0, %s79
      %s94 = sphi 0, %s80
      %s98 = sphi 0, %s98
      %s100 = sphi 0, %s98
      %s101 = sphi 0, %s100
      %s115 = sphi 0, %s101
      %s119 = sphi 0, %s119
      %s121 = sphi 0, %s119
      %s122 = sphi 0, %s121
      %s136 = sphi 0, %s122
      %s142 = sphi 0, %s144
      %s145 = sphi 0, %s142
      %s146 = sphi 0, %s145
      %s162 = sphi 0, %s146
      %s166 = sphi 0, %s166
      %s168 = sphi 0, %s166
      %s169 = sphi 0, %s168
      %s183 = sphi 0, %s169
    $region4: #{tpu_custom_call.1} parent=1 // loop_header_branch
      %25 = sbr.rel (%p23) target = $region8
    $region5: #{tpu_custom_call.1} parent=1 // loop_body
      %s27 = ssub.s32 %s22, 1
      %s28 = ssub.s32 %s22, 2
      %s29 = sadd.s32 %s22, 1
      %s30 = ssub.s32 %s22, %s29
      %p31 = scmp.eq.s32.totalorder %s30, 0
      %s33 = sadd.s32 %s32, 1
      %s34 = scalar_select %p31, %s32, %s33
      %p37 = pneg %p31
      %p38 = scmp.eq.s32.totalorder %s22, 1
      %p39 = por %p37, %p38
      %p40 = scmp.ne.s32.totalorder %s32, %s35
      %p41 = scmp.eq.s32.totalorder %s22, 0
      %p42 = por %p40, %p41
      %p43 = scmp.ne.s32.totalorder %s32, %s35
      %p44 = scmp.eq.s32.totalorder %s27, 1
      %p45 = por %p43, %p44
      %p46 = scmp.ne.s32.totalorder %s35, %s36
      %p47 = scmp.eq.s32.totalorder %s27, 0
      %p48 = por %p46, %p47
      %p49 = scmp.ne.s32.totalorder %s35, %s36
      %p50 = scmp.eq.s32.totalorder %s28, 1
      %p51 = por %p49, %p50
      %p53 = scmp.ne.s32.totalorder %s36, %s52
      %p54 = scmp.eq.s32.totalorder %s28, 0
      %p55 = por %p53, %p54
      %s57 = sadd.s32 %s56, 1
      %p60 = scmp.eq.s32.totalorder %s22, 1
      %p61 = scmp.ne.s32.totalorder %s56, %s58
      %p62 = scmp.eq.s32.totalorder %s22, 0
      %p63 = por %p61, %p62
      %p64 = scmp.ne.s32.totalorder %s56, %s58
      %p65 = scmp.eq.s32.totalorder %s27, 1
      %p66 = por %p64, %p65
      %p67 = scmp.ne.s32.totalorder %s58, %s59
      %p68 = scmp.eq.s32.totalorder %s27, 0
      %p69 = por %p67, %p68
      %p70 = scmp.ne.s32.totalorder %s58, %s59
      %p71 = scmp.eq.s32.totalorder %s28, 1
      %p72 = por %p70, %p71
      %p74 = scmp.ne.s32.totalorder %s59, %s73
      %p75 = scmp.eq.s32.totalorder %s28, 0
      %p76 = por %p74, %p75
      %s78 = sadd.s32 %s77, 1
      %p81 = scmp.eq.s32.totalorder %s22, 1
      %p82 = scmp.ne.s32.totalorder %s77, %s79
      %p83 = scmp.eq.s32.totalorder %s22, 0
      %p84 = por %p82, %p83
      %p85 = scmp.ne.s32.totalorder %s77, %s79
      %p86 = scmp.eq.s32.totalorder %s27, 1
      %p87 = por %p85, %p86
      %p88 = scmp.ne.s32.totalorder %s79, %s80
      %p89 = scmp.eq.s32.totalorder %s27, 0
      %p90 = por %p88, %p89
      %p91 = scmp.ne.s32.totalorder %s79, %s80
      %p92 = scmp.eq.s32.totalorder %s28, 1
      %p93 = por %p91, %p92
      %p95 = scmp.ne.s32.totalorder %s80, %s94
      %p96 = scmp.eq.s32.totalorder %s28, 0
      %p97 = por %p95, %p96
      %s99 = sadd.s32 %s98, 1
      %p102 = scmp.eq.s32.totalorder %s22, 1
      %p103 = scmp.ne.s32.totalorder %s98, %s100
      %p104 = scmp.eq.s32.totalorder %s22, 0
      %p105 = por %p103, %p104
      %p106 = scmp.ne.s32.totalorder %s98, %s100
      %p107 = scmp.eq.s32.totalorder %s27, 1
      %p108 = por %p106, %p107
      %p109 = scmp.ne.s32.totalorder %s100, %s101
      %p110 = scmp.eq.s32.totalorder %s27, 0
      %p111 = por %p109, %p110
      %p112 = scmp.ne.s32.totalorder %s100, %s101
      %p113 = scmp.eq.s32.totalorder %s28, 1
      %p114 = por %p112, %p113
      %p116 = scmp.ne.s32.totalorder %s101, %s115
      %p117 = scmp.eq.s32.totalorder %s28, 0
      %p118 = por %p116, %p117
      %s120 = sadd.s32 %s119, 1
      %p123 = scmp.eq.s32.totalorder %s22, 1
      %p124 = scmp.ne.s32.totalorder %s119, %s121
      %p125 = scmp.eq.s32.totalorder %s22, 0
      %p126 = por %p124, %p125
      %p127 = scmp.ne.s32.totalorder %s119, %s121
      %p128 = scmp.eq.s32.totalorder %s27, 1
      %p129 = por %p127, %p128
      %p130 = scmp.ne.s32.totalorder %s121, %s122
      %p131 = scmp.eq.s32.totalorder %s27, 0
      %p132 = por %p130, %p131
      %p133 = scmp.ne.s32.totalorder %s121, %s122
      %p134 = scmp.eq.s32.totalorder %s28, 1
      %p135 = por %p133, %p134
      %p137 = scmp.ne.s32.totalorder %s122, %s136
      %p138 = scmp.eq.s32.totalorder %s28, 0
      %p139 = por %p137, %p138
      %s140 = ssub.s32 %s22, %s29
      %p141 = scmp.eq.s32.totalorder %s140, 0
      %s143 = sadd.s32 %s142, 1
      %s144 = scalar_select %p141, %s142, %s143
      %p147 = pneg %p141
      %p148 = scmp.eq.s32.totalorder %s22, 1
      %p149 = por %p147, %p148
      %p150 = scmp.ne.s32.totalorder %s142, %s145
      %p151 = scmp.eq.s32.totalorder %s22, 0
      %p152 = por %p150, %p151
      %p153 = scmp.ne.s32.totalorder %s142, %s145
      %p154 = scmp.eq.s32.totalorder %s27, 1
      %p155 = por %p153, %p154
      %p156 = scmp.ne.s32.totalorder %s145, %s146
      %p157 = scmp.eq.s32.totalorder %s27, 0
      %p158 = por %p156, %p157
      %p159 = scmp.ne.s32.totalorder %s145, %s146
      %p160 = scmp.eq.s32.totalorder %s28, 1
      %p161 = por %p159, %p160
      %p163 = scmp.ne.s32.totalorder %s146, %s162
      %p164 = scmp.eq.s32.totalorder %s28, 0
      %p165 = por %p163, %p164
      %s167 = sadd.s32 %s166, 1
      %p170 = scmp.eq.s32.totalorder %s22, 1
      %p171 = scmp.ne.s32.totalorder %s166, %s168
      %p172 = scmp.eq.s32.totalorder %s22, 0
      %p173 = por %p171, %p172
      %p174 = scmp.ne.s32.totalorder %s166, %s168
      %p175 = scmp.eq.s32.totalorder %s27, 1
      %p176 = por %p174, %p175
      %p177 = scmp.ne.s32.totalorder %s168, %s169
      %p178 = scmp.eq.s32.totalorder %s27, 0
      %p179 = por %p177, %p178
      %p180 = scmp.ne.s32.totalorder %s168, %s169
      %p181 = scmp.eq.s32.totalorder %s28, 1
      %p182 = por %p180, %p181
      %p184 = scmp.ne.s32.totalorder %s169, %s183
      %p185 = scmp.eq.s32.totalorder %s28, 0
      %p186 = por %p184, %p185
      %p187 = scmp.le.s32.totalorder 1, %s22
      %p188 = scmp.lt.s32.totalorder %s22, 3
      %p189 = pnand %p187, %p188
      %p190 = pneg %p189
      // Predicated region
      $region9: #{tpu_custom_call.1} parent=5 // pred_check
        _
      $region10: #{tpu_custom_call.1} parent=5 // pred_check_branch
        %192 = sbr.rel (%p189) target = $region12
      $region11: #{tpu_custom_call.1} parent=5 // pred_region
        %s193 = ssub.s32 %s22, 1
        // Predicated region
        $region13: #{tpu_custom_call.1} parent=11 // pred_check
          %p194 = pneg %p69
        $region14: #{tpu_custom_call.1} parent=11 // pred_check_branch
          %196 = sbr.rel (%p194) target = $region16
        $region15: #{tpu_custom_call.1} parent=11 // pred_region
          %s198 = ssub.s32 128, 128
          %199 = vsyncadd [#allocation7], %s198
          %s201 = sshll.u32 [#allocation6], 4
          %s202 = int_to_ptr.vmem [resolvable:$true] %s201
          %204 = dma.hbm_to_vmem [thread:$0]  %s1, 128, %s202, [#allocation7]
        $region16: #{tpu_custom_call.1} parent=11 // pred_fallthru
          _
        // Predicated region
        $region17: #{tpu_custom_call.1} parent=11 // pred_check
          %p205 = pneg %p90
        $region18: #{tpu_custom_call.1} parent=11 // pred_check_branch
          %207 = sbr.rel (%p205) target = $region20
        $region19: #{tpu_custom_call.1} parent=11 // pred_region
          %s209 = ssub.s32 512, 512
          %210 = vsyncadd [#allocation7], %s209
          %s211 = sshll.u32 [#allocation8], 4
          %s212 = int_to_ptr.vmem [resolvable:$true] %s211
          %217 = dma.hbm_to_vmem [thread:$0]  %s2, 512, %s212, [#allocation7], 64, 64, 4
        $region20: #{tpu_custom_call.1} parent=11 // pred_fallthru
          _
        // Predicated region
        $region21: #{tpu_custom_call.1} parent=11 // pred_check
          %p218 = pneg %p111
        $region22: #{tpu_custom_call.1} parent=11 // pred_check_branch
          %220 = sbr.rel (%p218) target = $region24
        $region23: #{tpu_custom_call.1} parent=11 // pred_region
          %s222 = ssub.s32 1024, 1024
          %223 = vsyncadd [#allocation10], %s222
          %s224 = sshll.u32 [#allocation9], 4
          %s225 = int_to_ptr.vmem [resolvable:$true] %s224
          %230 = dma.hbm_to_vmem [thread:$0]  %s3, 1024, %s225, [#allocation10], 64, 64, 4
        $region24: #{tpu_custom_call.1} parent=11 // pred_fallthru
          _
        // Predicated region
        $region25: #{tpu_custom_call.1} parent=11 // pred_check
          %p231 = pneg %p132
        $region26: #{tpu_custom_call.1} parent=11 // pred_check_branch
          %233 = sbr.rel (%p231) target = $region28
        $region27: #{tpu_custom_call.1} parent=11 // pred_region
          _
        $region28: #{tpu_custom_call.1} parent=11 // pred_fallthru
          _
      $region12: #{tpu_custom_call.1} parent=5 // pred_fallthru
        _
      %p234 = scmp.lt.s32.totalorder %s22, 2
      // Predicated region
      $region29: #{tpu_custom_call.1} parent=5 // pred_check
        %p235 = pneg %p234
      $region30: #{tpu_custom_call.1} parent=5 // pred_check_branch
        %237 = sbr.rel (%p235) target = $region32
      $region31: #{tpu_custom_call.1} parent=5 // pred_region
        // Predicated region
        $region33: #{tpu_custom_call.1} parent=31 // pred_check
          %p238 = pneg %p42
        $region34: #{tpu_custom_call.1} parent=31 // pred_check_branch
          %240 = sbr.rel (%p238) target = $region36
        $region35: #{tpu_custom_call.1} parent=31 // pred_region
          %s241 = sand.u32 %s32, 1
          %s242 = scalar_lea.sflag [#allocation4], %s241
          %s243 = sand.u32 %s32, 1
          %s244 = smul.addr %s243, 16
          %s245 = scalar_lea.vmem [#allocation3], %s244
          %s246 = smul.u32 4, %s22
          %s248 = ssub.s32 256, 256
          %249 = vsyncadd %s242, %s248
          %s250 = smul.addr %s246, 64
          %s251 = scalar_lea.hbm %s0, %s250
          %s252 = sshll.u32 %s245, 4
          %s253 = int_to_ptr.vmem [resolvable:$true] %s252
          %258 = dma.hbm_to_vmem [thread:$0]  %s251, 256, %s253, %s242, 64, 64, 4
        $region36: #{tpu_custom_call.1} parent=31 // pred_fallthru
          _
      $region32: #{tpu_custom_call.1} parent=5 // pred_fallthru
        _
      %p259 = scmp.le.s32.totalorder 1, %s22
      %p260 = scmp.lt.s32.totalorder %s22, 3
      %p261 = pnand %p259, %p260
      %p262 = pneg %p261
      // Predicated region
      $region37: #{tpu_custom_call.1} parent=5 // pred_check
        _
      $region38: #{tpu_custom_call.1} parent=5 // pred_check_branch
        %264 = sbr.rel (%p261) target = $region40
      $region39: #{tpu_custom_call.1} parent=5 // pred_region
        %s265 = ssub.s32 %s22, 1
        %s266 = sand.u32 %s35, 1
        %s267 = scalar_lea.sflag [#allocation4], %s266
        %s268 = sand.u32 %s35, 1
        %s269 = smul.addr %s268, 16
        %s270 = scalar_lea.vmem [#allocation3], %s269
        // Predicated region
        $region41: #{tpu_custom_call.1} parent=39 // pred_check
          %p271 = pneg %p48
        $region42: #{tpu_custom_call.1} parent=39 // pred_check_branch
          %273 = sbr.rel (%p271) target = $region44
        $region43: #{tpu_custom_call.1} parent=39 // pred_region
          %274 = dma.done %s267, 256
        $region44: #{tpu_custom_call.1} parent=39 // pred_fallthru
          _
        // Predicated region
        $region45: #{tpu_custom_call.1} parent=39 // pred_check
          %p275 = pneg %p69
        $region46: #{tpu_custom_call.1} parent=39 // pred_check_branch
          %277 = sbr.rel (%p275) target = $region48
        $region47: #{tpu_custom_call.1} parent=39 // pred_region
          %278 = dma.done [#allocation7], 128
        $region48: #{tpu_custom_call.1} parent=39 // pred_fallthru
          _
        // Predicated region
        $region49: #{tpu_custom_call.1} parent=39 // pred_check
          %p279 = pneg %p90
        $region50: #{tpu_custom_call.1} parent=39 // pred_check_branch
          %281 = sbr.rel (%p279) target = $region52
        $region51: #{tpu_custom_call.1} parent=39 // pred_region
          %282 = dma.done [#allocation7], 512
        $region52: #{tpu_custom_call.1} parent=39 // pred_fallthru
          _
        // Predicated region
        $region53: #{tpu_custom_call.1} parent=39 // pred_check
          %p283 = pneg %p111
        $region54: #{tpu_custom_call.1} parent=39 // pred_check_branch
          %285 = sbr.rel (%p283) target = $region56
        $region55: #{tpu_custom_call.1} parent=39 // pred_region
          %286 = dma.done [#allocation10], 1024
        $region56: #{tpu_custom_call.1} parent=39 // pred_fallthru
          _
        %s287 = sand.u32 %s35, 1
        %s288 = scalar_lea.sflag [#allocation4], %s287
        %s289 = sand.u32 %s35, 1
        %s290 = smul.addr %s289, 16
        %s291 = scalar_lea.vmem [#allocation3], %s290
        %p292 = pneg %p48
        %p293 = pneg %p45
        %p294 = pneg %p69
        %p295 = pneg %p66
        %p296 = pneg %p90
        %p297 = pneg %p87
        %p298 = pneg %p111
        %p299 = pneg %p108
        %p300 = pneg %p132
        %p301 = pneg %p129
        %p302 = pneg %p158
        %p303 = pneg %p155
        %s304 = sand.u32 %s145, 1
        %s305 = scalar_lea.sflag [#allocation5], %s304
        %s306 = sand.u32 %s145, 1
        %s307 = smul.addr %s306, 16
        %s308 = scalar_lea.vmem [#allocation11], %s307
        %p309 = pneg %p179
        %p310 = pneg %p176
        %s311 = smul.u32 4, %s27
        %s312 = smul.u32 4, %s27
        %p314 = scmp.eq.s32.totalorder %s27, 0
        // Predicated region
        $region57: #{tpu_custom_call.1} parent=39 // pred_check
          %p315 = pneg %p314
        $region58: #{tpu_custom_call.1} parent=39 // pred_check_branch
          %317 = sbr.rel (%p315) target = $region60
        $region59: #{tpu_custom_call.1} parent=39 // pred_region
          %v318 = vld [vmem:[#allocation6] sm:$0xff]
          %319 = vst [vmem:[#allocation2] sm:$0xff] %v318
        $region60: #{tpu_custom_call.1} parent=39 // pred_fallthru
          _
        %v320 = vld [vmem:[%s270] sm:$0xf]
        %v321 = vld [vmem:[%s270 + $0x4] sm:$0xf]
        %v322 = vld [vmem:[%s270 + $0x8] sm:$0xf]
        %v323 = vld [vmem:[%s270 + $0xc] sm:$0xf]
        %v324 = vld [vmem:[#allocation8] sm:$0xf]
        %v325 = vld [vmem:[#allocation8 + $0x4] sm:$0xf]
        %v326 = vld [vmem:[#allocation8 + $0x8] sm:$0xf]
        %v327 = vld [vmem:[#allocation8 + $0xc] sm:$0xf]
        %v328 = vld [vmem:[#allocation8 + $0x10] sm:$0xf]
        %v329 = vld [vmem:[#allocation8 + $0x14] sm:$0xf]
        %v330 = vld [vmem:[#allocation8 + $0x18] sm:$0xf]
        %v331 = vld [vmem:[#allocation8 + $0x1c] sm:$0xf]
        %v332 = vld [vmem:[%s4] sm:$0x1]
        %v334 = vlaneseq
        %v335 = vshrl.u32 %v334, 7
        %v336 = vsub.s32 0, %v335
        %v337 = vrot.slane %v332, %v336
        %v343 = vunpack.c.l.b16 %v320
        %v344 = vunpack.c.l.b16 %v321
        %v345 = vunpack.c.l.b16 %v322
        %v346 = vunpack.c.l.b16 %v323
        %v347 = vpack.c.b16 %v344, %v343
        %v348 = vpack.c.b16 %v346, %v345
        %v357 = vunpack.c.l.b16 %v324
        %v358 = vunpack.c.l.b16 %v325
        %v359 = vunpack.c.l.b16 %v326
        %v360 = vunpack.c.l.b16 %v327
        %v361 = vunpack.c.l.b16 %v328
        %v362 = vunpack.c.l.b16 %v329
        %v363 = vunpack.c.l.b16 %v330
        %v364 = vunpack.c.l.b16 %v331
        %v365 = vpack.c.b16 %v358, %v357
        %v366 = vpack.c.b16 %v360, %v359
        %v367 = vpack.c.b16 %v362, %v361
        %v368 = vpack.c.b16 %v364, %v363
        %vm373 = vcmask 523264
        %v375 = vsel %vm373, %v347, 0
        %v378 = vsel %vm373, %v348, 0
        %380 = vmatprep.subr.bf16.mxu0 0
        %381 = vmatpush1.bf16.msra.mxu0 0
        %382 = vmatprep.subr.bf16.mxu0 0
        %383 = vmatpush1.bf16.msra.mxu0 0
        %384 = vmatprep.subr.bf16.mxu0 0
        %385 = vmatpush1.bf16.msra.mxu0 0
        %386 = vmatprep.subr.bf16.mxu0 0
        %387 = vmatpush1.bf16.msra.mxu0 0
        %388 = vmatprep.subr.bf16.mxu0 0
        %389 = vmatpush1.bf16.msra.mxu0 %v368
        %390 = vmatprep.subr.bf16.mxu0 0
        %391 = vmatpush1.bf16.msra.mxu0 %v367
        %392 = vmatprep.subr.bf16.mxu0 0
        %393 = vmatpush1.bf16.msra.mxu0 %v366
        %394 = vmatprep.subr.bf16.mxu0 0
        %395 = vmatpush1.bf16.msra.mxu0 %v365
        %396 = vmatprep.subr.bf16.mxu0 0
        %397 = vmatpush2.bf16.msra.mxu0 0
        %398 = vmatprep.subr.bf16.mxu0 0
        %399 = vmatpush2.bf16.msra.mxu0 0
        %400 = vmatprep.subr.bf16.mxu0 0
        %401 = vmatpush2.bf16.msra.mxu0 0
        %402 = vmatprep.subr.bf16.mxu0 0
        %403 = vmatpush2.bf16.msra.mxu0 0
        %404 = vmatprep.subr.bf16.mxu0 0
        %405 = vmatpush2.bf16.msra.mxu0 0
        %406 = vmatprep.subr.bf16.mxu0 0
        %407 = vmatpush2.bf16.msra.mxu0 0
        %408 = vmatprep.subr.bf16.mxu0 0
        %409 = vmatpush2.bf16.msra.mxu0 0
        %410 = vmatprep.subr.bf16.mxu0 0
        %411 = vmatpush2.bf16.msra.mxu0 0
        %412 = vmatprep.mubr.bf16.mxu0 0
        %413 = vmatmul.mubr.bf16.gmra.mxu0 %v375
        %v414 = vpop.f32.mrf.mxu0
        %v415 = vadd.f32 %v337, %v414
        %v416 = vpop.f32.mrf.mxu0
        %v417 = vpop.f32.mrf.mxu0
        %v418 = vadd.f32 %v337, %v417
        %v419 = vpop.f32.mrf.mxu0
        %420 = vmatprep.mubr.bf16.mxu0 0
        %421 = vmatmul.mubr.bf16.gmra.mxu0 %v378
        %v422 = vpop.f32.mrf.mxu0
        %v423 = vadd.f32 %v337, %v422
        %v424 = vpop.f32.mrf.mxu0
        %v425 = vpop.f32.mrf.mxu0
        %v426 = vadd.f32 %v337, %v425
        %v427 = vpop.f32.mrf.mxu0
        %428 = vdwg.mxu0
        %v429 = vpack.c.bf16 %v418, %v415
        %v430 = vpack.c.bf16 %v426, %v423
        %v433 = vunpack.c.l.b16 %v429
        %v434 = vunpack.c.h.b16 %v429
        %v435 = vunpack.c.l.b16 %v430
        %v436 = vunpack.c.h.b16 %v430
        %v437 = vpack.c.b16 %v433, %v433
        %v438 = vpack.c.b16 %v434, %v434
        %v439 = vpack.c.b16 %v435, %v435
        %v440 = vpack.c.b16 %v436, %v436
        %445 = vst [vmem:[%s308] sm:$0xf] %v437
        %446 = vst [vmem:[%s308 + $0x4] sm:$0xf] %v438
        %447 = vst [vmem:[%s308 + $0x8] sm:$0xf] %v439
        %448 = vst [vmem:[%s308 + $0xc] sm:$0xf] %v440
        %v449 = vld [vmem:[#allocation9] sm:$0xf]
        %v450 = vld [vmem:[#allocation9 + $0x4] sm:$0xf]
        %v451 = vld [vmem:[#allocation9 + $0x8] sm:$0xf]
        %v452 = vld [vmem:[#allocation9 + $0xc] sm:$0xf]
        %v453 = vld [vmem:[#allocation9 + $0x10] sm:$0xf]
        %v454 = vld [vmem:[#allocation9 + $0x14] sm:$0xf]
        %v455 = vld [vmem:[#allocation9 + $0x18] sm:$0xf]
        %v456 = vld [vmem:[#allocation9 + $0x1c] sm:$0xf]
        %v457 = vld [vmem:[#allocation9 + $0x20] sm:$0xf]
        %v458 = vld [vmem:[#allocation9 + $0x24] sm:$0xf]
        %v459 = vld [vmem:[#allocation9 + $0x28] sm:$0xf]
        %v460 = vld [vmem:[#allocation9 + $0x2c] sm:$0xf]
        %v461 = vld [vmem:[#allocation9 + $0x30] sm:$0xf]
        %v462 = vld [vmem:[#allocation9 + $0x34] sm:$0xf]
        %v463 = vld [vmem:[#allocation9 + $0x38] sm:$0xf]
        %v464 = vld [vmem:[#allocation9 + $0x3c] sm:$0xf]
        %v465 = vld [vmem:[#allocation2] sm:$0xff]
        %v466 = vld [vmem:[%s308] sm:$0xf]
        %v467 = vunpack.c.l.bf16 %v466
        %v468 = vpack.c.bf16 %v465, %v465
        %v485 = vunpack.c.l.b16 %v449
        %v486 = vunpack.c.l.b16 %v450
        %v487 = vunpack.c.l.b16 %v451
        %v488 = vunpack.c.l.b16 %v452
        %v489 = vunpack.c.l.b16 %v453
        %v490 = vunpack.c.l.b16 %v454
        %v491 = vunpack.c.l.b16 %v455
        %v492 = vunpack.c.l.b16 %v456
        %v493 = vunpack.c.l.b16 %v457
        %v494 = vunpack.c.l.b16 %v458
        %v495 = vunpack.c.l.b16 %v459
        %v496 = vunpack.c.l.b16 %v460
        %v497 = vunpack.c.l.b16 %v461
        %v498 = vunpack.c.l.b16 %v462
        %v499 = vunpack.c.l.b16 %v463
        %v500 = vunpack.c.l.b16 %v464
        %v501 = vpack.c.b16 %v486, %v485
        %v502 = vpack.c.b16 %v488, %v487
        %v503 = vpack.c.b16 %v490, %v489
        %v504 = vpack.c.b16 %v492, %v491
        %v505 = vpack.c.b16 %v494, %v493
        %v506 = vpack.c.b16 %v496, %v495
        %v507 = vpack.c.b16 %v498, %v497
        %v508 = vpack.c.b16 %v500, %v499
        %517 = vmatprep.subr.bf16.mxu0 0
        %518 = vmatpush1.bf16.msra.mxu0 %v508
        %519 = vmatprep.subr.bf16.mxu0 0
        %520 = vmatpush1.bf16.msra.mxu0 %v507
        %521 = vmatprep.subr.bf16.mxu0 0
        %522 = vmatpush1.bf16.msra.mxu0 %v506
        %523 = vmatprep.subr.bf16.mxu0 0
        %524 = vmatpush1.bf16.msra.mxu0 %v505
        %525 = vmatprep.subr.bf16.mxu0 0
        %526 = vmatpush1.bf16.msra.mxu0 %v504
        %527 = vmatprep.subr.bf16.mxu0 0
        %528 = vmatpush1.bf16.msra.mxu0 %v503
        %529 = vmatprep.subr.bf16.mxu0 0
        %530 = vmatpush1.bf16.msra.mxu0 %v502
        %531 = vmatprep.subr.bf16.mxu0 0
        %532 = vmatpush1.bf16.msra.mxu0 %v501
        %533 = vmatprep.subr.bf16.mxu0 0
        %534 = vmatpush2.bf16.msra.mxu0 0
        %535 = vmatprep.subr.bf16.mxu0 0
        %536 = vmatpush2.bf16.msra.mxu0 0
        %537 = vmatprep.subr.bf16.mxu0 0
        %538 = vmatpush2.bf16.msra.mxu0 0
        %539 = vmatprep.subr.bf16.mxu0 0
        %540 = vmatpush2.bf16.msra.mxu0 0
        %541 = vmatprep.subr.bf16.mxu0 0
        %542 = vmatpush2.bf16.msra.mxu0 0
        %543 = vmatprep.subr.bf16.mxu0 0
        %544 = vmatpush2.bf16.msra.mxu0 0
        %545 = vmatprep.subr.bf16.mxu0 0
        %546 = vmatpush2.bf16.msra.mxu0 0
        %547 = vmatprep.subr.bf16.mxu0 0
        %548 = vmatpush2.bf16.msra.mxu0 0
        %549 = vmatprep.mubr.bf16.mxu0 0
        %550 = vmatmul.mubr.bf16.gmra.mxu0 %v468
        %v551 = vpop.f32.mrf.mxu0
        %v552 = vadd.f32 0.0, %v551
        %v553 = vpop.f32.mrf.mxu0
        %v554 = vpop.f32.mrf.mxu0
        %v555 = vpop.f32.mrf.mxu0
        %556 = vdwg.mxu0
        %v557 = vadd.f32 %v467, %v552
        %v558 = vtanh.pop %v557
        %v559 = vpack.c.bf16 %v558, %v558
        %560 = vst [vmem:[%s308] sm:$0xf] %v559
        %s561 = scalar_lea.vmem %s308, 4 [#allocation11]
        %v562 = vld [vmem:[%s561] sm:$0xf]
        %v563 = vunpack.c.l.bf16 %v562
        %564 = vmatprep.subr.bf16.mxu0 0
        %565 = vmatpush1.bf16.msra.mxu0 %v508
        %566 = vmatprep.subr.bf16.mxu0 0
        %567 = vmatpush1.bf16.msra.mxu0 %v507
        %568 = vmatprep.subr.bf16.mxu0 0
        %569 = vmatpush1.bf16.msra.mxu0 %v506
        %570 = vmatprep.subr.bf16.mxu0 0
        %571 = vmatpush1.bf16.msra.mxu0 %v505
        %572 = vmatprep.subr.bf16.mxu0 0
        %573 = vmatpush1.bf16.msra.mxu0 %v504
        %574 = vmatprep.subr.bf16.mxu0 0
        %575 = vmatpush1.bf16.msra.mxu0 %v503
        %576 = vmatprep.subr.bf16.mxu0 0
        %577 = vmatpush1.bf16.msra.mxu0 %v502
        %578 = vmatprep.subr.bf16.mxu0 0
        %579 = vmatpush1.bf16.msra.mxu0 %v501
        %580 = vmatprep.subr.bf16.mxu0 0
        %581 = vmatpush2.bf16.msra.mxu0 0
        %582 = vmatprep.subr.bf16.mxu0 0
        %583 = vmatpush2.bf16.msra.mxu0 0
        %584 = vmatprep.subr.bf16.mxu0 0
        %585 = vmatpush2.bf16.msra.mxu0 0
        %586 = vmatprep.subr.bf16.mxu0 0
        %587 = vmatpush2.bf16.msra.mxu0 0
        %588 = vmatprep.subr.bf16.mxu0 0
        %589 = vmatpush2.bf16.msra.mxu0 0
        %590 = vmatprep.subr.bf16.mxu0 0
        %591 = vmatpush2.bf16.msra.mxu0 0
        %592 = vmatprep.subr.bf16.mxu0 0
        %593 = vmatpush2.bf16.msra.mxu0 0
        %594 = vmatprep.subr.bf16.mxu0 0
        %595 = vmatpush2.bf16.msra.mxu0 0
        %596 = vmatprep.mubr.bf16.mxu0 0
        %597 = vmatmul.mubr.bf16.gmra.mxu0 %v559
        %v598 = vpop.f32.mrf.mxu0
        %v599 = vadd.f32 0.0, %v598
        %v600 = vpop.f32.mrf.mxu0
        %v601 = vpop.f32.mrf.mxu0
        %v602 = vpop.f32.mrf.mxu0
        %603 = vdwg.mxu0
        %v604 = vadd.f32 %v563, %v599
        %v605 = vtanh.pop %v604
        %v606 = vpack.c.bf16 %v605, %v605
        %607 = vst [vmem:[%s561] sm:$0xf] %v606
        %s608 = scalar_lea.vmem %s308, 8 [#allocation11]
        %v609 = vld [vmem:[%s608] sm:$0xf]
        %v610 = vunpack.c.l.bf16 %v609
        %611 = vmatprep.subr.bf16.mxu0 0
        %612 = vmatpush1.bf16.msra.mxu0 %v508
        %613 = vmatprep.subr.bf16.mxu0 0
        %614 = vmatpush1.bf16.msra.mxu0 %v507
        %615 = vmatprep.subr.bf16.mxu0 0
        %616 = vmatpush1.bf16.msra.mxu0 %v506
        %617 = vmatprep.subr.bf16.mxu0 0
        %618 = vmatpush1.bf16.msra.mxu0 %v505
        %619 = vmatprep.subr.bf16.mxu0 0
        %620 = vmatpush1.bf16.msra.mxu0 %v504
        %621 = vmatprep.subr.bf16.mxu0 0
        %622 = vmatpush1.bf16.msra.mxu0 %v503
        %623 = vmatprep.subr.bf16.mxu0 0
        %624 = vmatpush1.bf16.msra.mxu0 %v502
        %625 = vmatprep.subr.bf16.mxu0 0
        %626 = vmatpush1.bf16.msra.mxu0 %v501
        %627 = vmatprep.subr.bf16.mxu0 0
        %628 = vmatpush2.bf16.msra.mxu0 0
        %629 = vmatprep.subr.bf16.mxu0 0
        %630 = vmatpush2.bf16.msra.mxu0 0
        %631 = vmatprep.subr.bf16.mxu0 0
        %632 = vmatpush2.bf16.msra.mxu0 0
        %633 = vmatprep.subr.bf16.mxu0 0
        %634 = vmatpush2.bf16.msra.mxu0 0
        %635 = vmatprep.subr.bf16.mxu0 0
        %636 = vmatpush2.bf16.msra.mxu0 0
        %637 = vmatprep.subr.bf16.mxu0 0
        %638 = vmatpush2.bf16.msra.mxu0 0
        %639 = vmatprep.subr.bf16.mxu0 0
        %640 = vmatpush2.bf16.msra.mxu0 0
        %641 = vmatprep.subr.bf16.mxu0 0
        %642 = vmatpush2.bf16.msra.mxu0 0
        %643 = vmatprep.mubr.bf16.mxu0 0
        %644 = vmatmul.mubr.bf16.gmra.mxu0 %v606
        %v645 = vpop.f32.mrf.mxu0
        %v646 = vadd.f32 0.0, %v645
        %v647 = vpop.f32.mrf.mxu0
        %v648 = vpop.f32.mrf.mxu0
        %v649 = vpop.f32.mrf.mxu0
        %650 = vdwg.mxu0
        %v651 = vadd.f32 %v610, %v646
        %v652 = vtanh.pop %v651
        %v653 = vpack.c.bf16 %v652, %v652
        %654 = vst [vmem:[%s608] sm:$0xf] %v653
        %s655 = scalar_lea.vmem %s308, 12 [#allocation11]
        %v656 = vld [vmem:[%s655] sm:$0xf]
        %v657 = vunpack.c.l.bf16 %v656
        %658 = vmatprep.subr.bf16.mxu0 0
        %659 = vmatpush1.bf16.msra.mxu0 %v508
        %660 = vmatprep.subr.bf16.mxu0 0
        %661 = vmatpush1.bf16.msra.mxu0 %v507
        %662 = vmatprep.subr.bf16.mxu0 0
        %663 = vmatpush1.bf16.msra.mxu0 %v506
        %664 = vmatprep.subr.bf16.mxu0 0
        %665 = vmatpush1.bf16.msra.mxu0 %v505
        %666 = vmatprep.subr.bf16.mxu0 0
        %667 = vmatpush1.bf16.msra.mxu0 %v504
        %668 = vmatprep.subr.bf16.mxu0 0
        %669 = vmatpush1.bf16.msra.mxu0 %v503
        %670 = vmatprep.subr.bf16.mxu0 0
        %671 = vmatpush1.bf16.msra.mxu0 %v502
        %672 = vmatprep.subr.bf16.mxu0 0
        %673 = vmatpush1.bf16.msra.mxu0 %v501
        %674 = vmatprep.subr.bf16.mxu0 0
        %675 = vmatpush2.bf16.msra.mxu0 0
        %676 = vmatprep.subr.bf16.mxu0 0
        %677 = vmatpush2.bf16.msra.mxu0 0
        %678 = vmatprep.subr.bf16.mxu0 0
        %679 = vmatpush2.bf16.msra.mxu0 0
        %680 = vmatprep.subr.bf16.mxu0 0
        %681 = vmatpush2.bf16.msra.mxu0 0
        %682 = vmatprep.subr.bf16.mxu0 0
        %683 = vmatpush2.bf16.msra.mxu0 0
        %684 = vmatprep.subr.bf16.mxu0 0
        %685 = vmatpush2.bf16.msra.mxu0 0
        %686 = vmatprep.subr.bf16.mxu0 0
        %687 = vmatpush2.bf16.msra.mxu0 0
        %688 = vmatprep.subr.bf16.mxu0 0
        %689 = vmatpush2.bf16.msra.mxu0 0
        %690 = vmatprep.mubr.bf16.mxu0 0
        %691 = vmatmul.mubr.bf16.gmra.mxu0 %v653
        %v692 = vpop.f32.mrf.mxu0
        %v693 = vadd.f32 0.0, %v692
        %v694 = vpop.f32.mrf.mxu0
        %v695 = vpop.f32.mrf.mxu0
        %v696 = vpop.f32.mrf.mxu0
        %697 = vdwg.mxu0
        %v698 = vadd.f32 %v657, %v693
        %v699 = vtanh.pop %v698
        %v700 = vpack.c.bf16 %v699, %v699
        %701 = vst [vmem:[%s655] sm:$0xf] %v700
        %702 = vst [vmem:[#allocation2] sm:$0xff] %v699
        %703 = vst [vmem:[#allocation12] sm:$0xff] %v699
        %s704 = sand.u32 %s145, 1
        %s705 = scalar_lea.sflag [#allocation5], %s704
        %s706 = sand.u32 %s145, 1
        %s707 = smul.addr %s706, 16
        %s708 = scalar_lea.vmem [#allocation11], %s707
        // Predicated region
        $region61: #{tpu_custom_call.1} parent=39 // pred_check
          %p709 = pneg %p155
        $region62: #{tpu_custom_call.1} parent=39 // pred_check_branch
          %711 = sbr.rel (%p709) target = $region64
        $region63: #{tpu_custom_call.1} parent=39 // pred_region
          %s712 = smul.u32 4, %s27
          %s714 = ssub.s32 256, 256
          %715 = vsyncadd %s705, %s714
          %s716 = smul.addr %s712, 64
          %s717 = scalar_lea.hbm %s5, %s716
          %s718 = sshll.u32 %s708, 4
          %s719 = int_to_ptr.vmem [resolvable:$true] %s718
          %724 = dma.vmem_to_hbm [thread:$0]  %s719, 256, %s717, %s705, 64, 64, 4
        $region64: #{tpu_custom_call.1} parent=39 // pred_fallthru
          _
        // Predicated region
        $region65: #{tpu_custom_call.1} parent=39 // pred_check
          %p725 = pneg %p176
        $region66: #{tpu_custom_call.1} parent=39 // pred_check_branch
          %727 = sbr.rel (%p725) target = $region68
        $region67: #{tpu_custom_call.1} parent=39 // pred_region
          %s729 = ssub.s32 128, 128
          %730 = vsyncadd [#allocation13], %s729
          %s732 = sshll.u32 [#allocation12], 4
          %s733 = int_to_ptr.vmem [resolvable:$true] %s732
          %735 = dma.vmem_to_hbm [thread:$0]  %s733, 128, %s6, [#allocation13]
        $region68: #{tpu_custom_call.1} parent=39 // pred_fallthru
          _
        // Predicated region
        $region69: #{tpu_custom_call.1} parent=39 // pred_check
          %p736 = pneg %p176
        $region70: #{tpu_custom_call.1} parent=39 // pred_check_branch
          %738 = sbr.rel (%p736) target = $region72
        $region71: #{tpu_custom_call.1} parent=39 // pred_region
          %739 = dma.done [#allocation13], 128
        $region72: #{tpu_custom_call.1} parent=39 // pred_fallthru
          _
      $region40: #{tpu_custom_call.1} parent=5 // pred_fallthru
        _
      %p740 = scmp.le.s32.totalorder 2, %s22
      // Predicated region
      $region73: #{tpu_custom_call.1} parent=5 // pred_check
        %p741 = pneg %p740
      $region74: #{tpu_custom_call.1} parent=5 // pred_check_branch
        %743 = sbr.rel (%p741) target = $region76
      $region75: #{tpu_custom_call.1} parent=5 // pred_region
        %s744 = ssub.s32 %s22, 2
        // Predicated region
        $region77: #{tpu_custom_call.1} parent=75 // pred_check
          %p745 = pneg %p161
        $region78: #{tpu_custom_call.1} parent=75 // pred_check_branch
          %747 = sbr.rel (%p745) target = $region80
        $region79: #{tpu_custom_call.1} parent=75 // pred_region
          %s748 = sand.u32 %s146, 1
          %s749 = scalar_lea.sflag [#allocation5], %s748
          %s750 = sand.u32 %s146, 1
          %s751 = smul.addr %s750, 16
          %s752 = scalar_lea.vmem [#allocation11], %s751
          %753 = dma.done %s749, 256
        $region80: #{tpu_custom_call.1} parent=75 // pred_fallthru
          _
      $region76: #{tpu_custom_call.1} parent=5 // pred_fallthru
        _
    $region6: #{tpu_custom_call.1} parent=1 // loop_footer
      %s26 = sadd.s32 1, %s22
    $region7: #{tpu_custom_call.1} parent=1 // loop_footer_branch
      %21 = sbr.rel target = $region3
    $region8: #{tpu_custom_call.1} parent=1 // loop_exit
      _
    %754 = vsyncpa [#allocation4], 1
    %s755 = scalar_lea.sflag [#allocation4], 1
    %756 = vsyncpa %s755, 1
    %757 = vsyncpa [#allocation7], 1
    %758 = vsyncpa [#allocation10], 1
    %759 = vsyncpa [#allocation5], 1
    %s760 = scalar_lea.sflag [#allocation5], 1
    %761 = vsyncpa %s760, 1
    %762 = vsyncpa [#allocation13], 1

</llo_original>
